<compile_context>
chip_gen: v5e
topology: v5e:2x2
jax: 0.10.0
libtpu: 0.0.40
codegen_flags: <defaults>
</compile_context>

<pallas_src>
import jax
import jax.numpy as jnp
from jax import lax
from jax.experimental import pallas as pl
from jax.experimental.pallas import tpu as pltpu

# Small shapes consistent with the module (stride=1 identity path needs Cin==Cout).
N, H, W = 2, 16, 16
CIN = COUT = 8            # W * C == 128  -> exactly lane-dense
K = 3
PAD = 1
EPS = 1e-5                # PyTorch BatchNorm2d default

ROWS = N * H              # 32  (sublane axis)
COLS = W * COUT           # 128 (lane axis)
KCOLS = K * COLS          # 384 (fused contraction depth)
NPIX = N * H * W          # elements per channel for batch statistics


def _channel_totals(stats):
    """(2, COLS) per-column [sum; sumsq] -> per-channel totals, broadcast to
    every W-block along the lane axis (log2(W) roll-and-add; W power of 2)."""
    s = stats
    sh = COUT
    while sh < COLS:
        s = s + pltpu.roll(s, sh, axis=1)
        sh *= 2
    return s


def _batchnorm(y, gamma, beta, relu):
    """Training-mode BN (biased batch stats) folded into a scale/shift FMA."""
    stats = jnp.concatenate(
        [jnp.sum(y, axis=0, keepdims=True),
         jnp.sum(y * y, axis=0, keepdims=True)], axis=0)        # (2, COLS)
    tot = _channel_totals(stats)
    mean = tot[0:1] * (1.0 / NPIX)
    var = jnp.maximum(tot[1:2] * (1.0 / NPIX) - mean * mean, 0.0)
    scale = gamma * lax.rsqrt(var + EPS)
    shift = beta - mean * scale
    out = y * scale + shift
    return jnp.maximum(out, 0.0) if relu else out


def resnet_block_kernel(x_ref, wb_ref, bn_ref, o_ref):
    x2 = x_ref[...]                                             # (ROWS, COLS) f32
    bnv = bn_ref[...]                                           # (4, COLS)  f32

    # Hoisted H-boundary masks, shared by both convs.
    h_idx = lax.broadcasted_iota(jnp.int32, (ROWS, COLS), 0) % H
    mask_up = h_idx >= 1            # d = -1 tap valid (row above exists in image)
    mask_dn = h_idx < (H - 1)       # d = +1 tap valid (row below exists in image)

    def conv3x3(y, widx):
        # out[r] = x[r-1] @ Wband[0] + x[r] @ Wband[1] + x[r+1] @ Wband[2],
        # fused into one K=384 contraction (dy-major lane concat).
        up = jnp.where(mask_up, pltpu.roll(y, 1, axis=0), 0.0)          # x[r-1]
        dn = jnp.where(mask_dn, pltpu.roll(y, ROWS - 1, axis=0), 0.0)   # x[r+1]
        xs = jnp.concatenate([up, y, dn], axis=1).astype(jnp.bfloat16)  # (ROWS, 384)
        return jnp.dot(xs, wb_ref[widx], preferred_element_type=jnp.float32)

    h1 = _batchnorm(conv3x3(x2, 0), bnv[0:1], bnv[1:2], relu=True)
    h2 = _batchnorm(conv3x3(h1, 1), bnv[2:3], bnv[3:4], relu=False)
    o_ref[...] = jnp.maximum(h2 + x2, 0.0)      # identity residual + final ReLU


def resnet_block(x2, wb, bnp):
    """x2: (N*H, W*CIN) f32; wb: (2, K*W*Cin, W*Cout) bf16; bnp: (4, W*COUT) f32."""
    def full(shape):
        return pl.BlockSpec(shape, lambda i, s=shape: (0,) * len(s))

    return pl.pallas_call(
        resnet_block_kernel,
        out_shape=jax.ShapeDtypeStruct((ROWS, COLS), jnp.float32),
        grid=(1,),                      # whole-batch BN stats -> single program
        in_specs=[full(x2.shape), full(wb.shape), full(bnp.shape)],
        out_specs=full((ROWS, COLS)),
    )(x2, wb, bnp)


# ----------------------- host-side parameter packing -----------------------

def band_weights_flat(w_hwio):
    """(K,K,Cin,Cout) HWIO -> (K*W*Cin, W*Cout) dy-major block-banded weights.
    Wband[dy*W*Cin + xi*Cin + ci, xo*Cout + co] = w[dy, dx, ci, co],
    xi = xo + dx - PAD  (folds the 3 horizontal taps + W-direction zero pad)."""
    mats = []
    for dy in range(K):
        m = sum(jnp.kron(jnp.eye(W, k=PAD - dx, dtype=jnp.float32), w_hwio[dy, dx])
                for dx in range(K))
        mats.append(m)
    return jnp.concatenate(mats, axis=0)


def tile_bn(p):
    """(C,) per-channel BN param -> (1, W*C) lane-dense row matching (x*C + c)."""
    return jnp.tile(p.reshape(1, COUT), (1, W))


# --------------------------------- reference --------------------------------

def reference(x_nhwc, w1_hwio, g1, b1, w2_hwio, g2, b2):
    def conv(x, w):
        return lax.conv_general_dilated(
            x.astype(jnp.bfloat16), w.astype(jnp.bfloat16),
            window_strides=(1, 1), padding=((PAD, PAD), (PAD, PAD)),
            dimension_numbers=('NHWC', 'HWIO', 'NHWC'),
            preferred_element_type=jnp.float32)

    def bn(y, g, b):
        mean = y.mean(axis=(0, 1, 2), keepdims=True)
        var = ((y - mean) ** 2).mean(axis=(0, 1, 2), keepdims=True)
        return ((y - mean) * lax.rsqrt(var + EPS)
                * g.reshape(1, 1, 1, -1) + b.reshape(1, 1, 1, -1))

    h = jnp.maximum(bn(conv(x_nhwc, w1_hwio), g1, b1), 0.0)
    y = bn(conv(h, w2_hwio), g2, b2)
    return jnp.maximum(y + x_nhwc, 0.0)


if __name__ == "__main__":
    key = jax.random.PRNGKey(0)
    kx, kw1, kw2, kg1, kb1, kg2, kb2 = jax.random.split(key, 7)

    # PyTorch-style NCHW input -> NHWC -> lane-dense (N*H, W*C).
    x_nchw = jax.random.normal(kx, (N, CIN, H, W), jnp.float32)
    x_nhwc = jnp.transpose(x_nchw, (0, 2, 3, 1))
    x2 = x_nhwc.reshape(ROWS, W * CIN)

    # Deterministic synthetic parameters (conv weights HWIO, BN affine params).
    w1_hwio = 0.1 * jax.random.normal(kw1, (K, K, CIN, COUT), jnp.float32)
    w2_hwio = 0.1 * jax.random.normal(kw2, (K, K, COUT, COUT), jnp.float32)
    g1 = 1.0 + 0.1 * jax.random.normal(kg1, (COUT,), jnp.float32)
    b1 = 0.1 * jax.random.normal(kb1, (COUT,), jnp.float32)
    g2 = 1.0 + 0.1 * jax.random.normal(kg2, (COUT,), jnp.float32)
    b2 = 0.1 * jax.random.normal(kb2, (COUT,), jnp.float32)

    # Packed kernel parameters: (2, 384, 128) bf16 conv weights, (4, 128) f32 BN.
    wb = jnp.stack([band_weights_flat(w1_hwio),
                    band_weights_flat(w2_hwio)], axis=0).astype(jnp.bfloat16)
    bnp = jnp.concatenate([tile_bn(g1), tile_bn(b1),
                           tile_bn(g2), tile_bn(b2)], axis=0)

    out2 = resnet_block(x2, wb, bnp)
    out2 = jax.block_until_ready(out2)
    out = out2.reshape(N, H, W, COUT)

    ref = reference(x_nhwc, w1_hwio, g1, b1, w2_hwio, g2, b2)
    assert out.shape == (N, H, W, COUT)
    assert jnp.allclose(out, ref, atol=1e-2, rtol=1e-2), \
        f"max abs err {float(jnp.max(jnp.abs(out - ref)))}"

    print("KERNEL_OK")
</pallas_src>

<mosaic_0001>
module attributes {stable_mosaic.version = 11 : i64} {
  func.func @resnet_block_kernel(%arg0: i32, %arg1: memref<32x128xf32, #tpu.memory_space<vmem>>, %arg2: memref<2x384x128xbf16, #tpu.memory_space<vmem>>, %arg3: memref<4x128xf32, #tpu.memory_space<vmem>>, %arg4: memref<32x128xf32, #tpu.memory_space<vmem>>) attributes {dimension_semantics = [#tpu.dimension_semantics<arbitrary>], iteration_bounds = array<i64: 1>, scalar_prefetch = 0 : i64, scratch_operands = 0 : i64, tpu.core_type = #tpu.core_type<tc>, window_params = [{pipeline_mode = #tpu.pipeline_mode<synchronous>, transform_indices = @transform_0, window_bounds = array<i64: 32, 128>}, {pipeline_mode = #tpu.pipeline_mode<synchronous>, transform_indices = @transform_1, window_bounds = array<i64: 2, 384, 128>}, {pipeline_mode = #tpu.pipeline_mode<synchronous>, transform_indices = @transform_2, window_bounds = array<i64: 4, 128>}, {pipeline_mode = #tpu.pipeline_mode<synchronous>, transform_indices = @transform_3, window_bounds = array<i64: 32, 128>}]} {
    %c0 = arith.constant 0 : index
    %c0_0 = arith.constant 0 : index
    %0 = vector.load %arg1[%c0, %c0_0] : memref<32x128xf32, #tpu.memory_space<vmem>>, vector<32x128xf32>
    %c0_1 = arith.constant 0 : index
    %c0_2 = arith.constant 0 : index
    %1 = vector.load %arg3[%c0_1, %c0_2] : memref<4x128xf32, #tpu.memory_space<vmem>>, vector<4x128xf32>
    %2 = tpu.iota {dimensions = array<i32: 0>} : vector<32x128xi32>
    %c16_i32 = arith.constant 16 : i32
    %c0_i32 = arith.constant 0 : i32
    %3 = arith.cmpi eq, %c16_i32, %c0_i32 : i32
    %c1_i32 = arith.constant 1 : i32
    %4 = arith.select %3, %c1_i32, %c16_i32 : i32
    %5 = vector.broadcast %4 : i32 to vector<32x128xi32>
    %6 = arith.remsi %2, %5 : vector<32x128xi32>
    %c0_i32_3 = arith.constant 0 : i32
    %7 = vector.broadcast %c0_i32_3 : i32 to vector<32x128xi32>
    %8 = arith.cmpi ne, %6, %7 : vector<32x128xi32>
    %c0_i32_4 = arith.constant 0 : i32
    %9 = vector.broadcast %c0_i32_4 : i32 to vector<32x128xi32>
    %10 = arith.cmpi slt, %6, %9 : vector<32x128xi32>
    %c0_i32_5 = arith.constant 0 : i32
    %11 = arith.cmpi slt, %4, %c0_i32_5 : i32
    %12 = vector.broadcast %11 : i1 to vector<32x128xi1>
    %13 = vector.broadcast %12 : vector<32x128xi1> to vector<32x128xi1>
    %14 = arith.xori %10, %13 : vector<32x128xi1>
    %15 = arith.andi %14, %8 : vector<32x128xi1>
    %16 = vector.broadcast %4 : i32 to vector<32x128xi32>
    %17 = arith.addi %6, %16 : vector<32x128xi32>
    %18 = arith.select %15, %17, %6 : vector<32x128xi1>, vector<32x128xi32>
    %c1_i32_6 = arith.constant 1 : i32
    %19 = vector.broadcast %c1_i32_6 : i32 to vector<32x128xi32>
    %20 = arith.cmpi sge, %18, %19 : vector<32x128xi32>
    %c15_i32 = arith.constant 15 : i32
    %21 = vector.broadcast %c15_i32 : i32 to vector<32x128xi32>
    %22 = arith.cmpi slt, %18, %21 : vector<32x128xi32>
    %c1_i32_7 = arith.constant 1 : i32
    %23 = tpu.dynamic_rotate %0 by %c1_i32_7 dim 0 : vector<32x128xf32>, i32 -> vector<32x128xf32>
    %cst = arith.constant 0.000000e+00 : f32
    %24 = vector.broadcast %cst : f32 to vector<32x128xf32>
    %25 = arith.select %20, %23, %24 : vector<32x128xi1>, vector<32x128xf32>
    %c31_i32 = arith.constant 31 : i32
    %26 = tpu.dynamic_rotate %0 by %c31_i32 dim 0 : vector<32x128xf32>, i32 -> vector<32x128xf32>
    %cst_8 = arith.constant 0.000000e+00 : f32
    %27 = vector.broadcast %cst_8 : f32 to vector<32x128xf32>
    %28 = arith.select %22, %26, %27 : vector<32x128xi1>, vector<32x128xf32>
    %29 = tpu.concatenate %25, %0, %28 in 1 : vector<32x128xf32>, vector<32x128xf32>, vector<32x128xf32> -> vector<32x384xf32>
    %30 = arith.truncf %29 : vector<32x384xf32> to vector<32x384xbf16>
    %c0_9 = arith.constant 0 : index
    %c0_10 = arith.constant 0 : index
    %c0_11 = arith.constant 0 : index
    %31 = vector.load %arg2[%c0_9, %c0_10, %c0_11] : memref<2x384x128xbf16, #tpu.memory_space<vmem>>, vector<1x384x128xbf16>
    %32 = vector.shape_cast %31 : vector<1x384x128xbf16> to vector<384x128xbf16>
    %cst_12 = arith.constant dense<0.000000e+00> : vector<32x128xf32>
    %33 = tpu.matmul %30, %32, %cst_12 {dimension_numbers = #tpu.dot_dimension_numbers<[1], [0], [0], [1], [0, 0, 1, 1], [], []>} : vector<32x384xbf16>, vector<384x128xbf16>, vector<32x128xf32> -> vector<32x128xf32>
    %34 = vector.extract_strided_slice %1 {offsets = [0, 0], sizes = [1, 128], strides = [1, 1]} : vector<4x128xf32> to vector<1x128xf32>
    %35 = vector.extract_strided_slice %1 {offsets = [1, 0], sizes = [1, 128], strides = [1, 1]} : vector<4x128xf32> to vector<1x128xf32>
    %cst_13 = arith.constant dense<0.000000e+00> : vector<128xf32>
    %36 = vector.multi_reduction <add>, %33, %cst_13 [0] : vector<32x128xf32> to vector<128xf32>
    %37 = vector.shape_cast %36 : vector<128xf32> to vector<1x128xf32>
    %38 = arith.mulf %33, %33 : vector<32x128xf32>
    %cst_14 = arith.constant dense<0.000000e+00> : vector<128xf32>
    %39 = vector.multi_reduction <add>, %38, %cst_14 [0] : vector<32x128xf32> to vector<128xf32>
    %40 = vector.shape_cast %39 : vector<128xf32> to vector<1x128xf32>
    %41 = tpu.concatenate %37, %40 in 0 : vector<1x128xf32>, vector<1x128xf32> -> vector<2x128xf32>
    %c8_i32 = arith.constant 8 : i32
    %42 = tpu.dynamic_rotate %41 by %c8_i32 dim 1 : vector<2x128xf32>, i32 -> vector<2x128xf32>
    %43 = arith.addf %41, %42 : vector<2x128xf32>
    %c16_i32_15 = arith.constant 16 : i32
    %44 = tpu.dynamic_rotate %43 by %c16_i32_15 dim 1 : vector<2x128xf32>, i32 -> vector<2x128xf32>
    %45 = arith.addf %43, %44 : vector<2x128xf32>
    %c32_i32 = arith.constant 32 : i32
    %46 = tpu.dynamic_rotate %45 by %c32_i32 dim 1 : vector<2x128xf32>, i32 -> vector<2x128xf32>
    %47 = arith.addf %45, %46 : vector<2x128xf32>
    %c64_i32 = arith.constant 64 : i32
    %48 = tpu.dynamic_rotate %47 by %c64_i32 dim 1 : vector<2x128xf32>, i32 -> vector<2x128xf32>
    %49 = arith.addf %47, %48 : vector<2x128xf32>
    %50 = vector.extract_strided_slice %49 {offsets = [0, 0], sizes = [1, 128], strides = [1, 1]} : vector<2x128xf32> to vector<1x128xf32>
    %cst_16 = arith.constant 0.001953125 : f32
    %51 = vector.broadcast %cst_16 : f32 to vector<1x128xf32>
    %52 = arith.mulf %50, %51 : vector<1x128xf32>
    %53 = vector.extract_strided_slice %49 {offsets = [1, 0], sizes = [1, 128], strides = [1, 1]} : vector<2x128xf32> to vector<1x128xf32>
    %cst_17 = arith.constant 0.001953125 : f32
    %54 = vector.broadcast %cst_17 : f32 to vector<1x128xf32>
    %55 = arith.mulf %53, %54 : vector<1x128xf32>
    %56 = arith.mulf %52, %52 : vector<1x128xf32>
    %57 = arith.subf %55, %56 : vector<1x128xf32>
    %cst_18 = arith.constant 0.000000e+00 : f32
    %58 = vector.broadcast %cst_18 : f32 to vector<1x128xf32>
    %59 = arith.maximumf %57, %58 : vector<1x128xf32>
    %cst_19 = arith.constant 9.99999974E-6 : f32
    %60 = vector.broadcast %cst_19 : f32 to vector<1x128xf32>
    %61 = arith.addf %59, %60 : vector<1x128xf32>
    %62 = math.rsqrt %61 : vector<1x128xf32>
    %63 = arith.mulf %34, %62 : vector<1x128xf32>
    %64 = arith.mulf %52, %63 : vector<1x128xf32>
    %65 = arith.subf %35, %64 : vector<1x128xf32>
    %66 = vector.broadcast %63 : vector<1x128xf32> to vector<32x128xf32>
    %67 = arith.mulf %33, %66 : vector<32x128xf32>
    %68 = vector.broadcast %65 : vector<1x128xf32> to vector<32x128xf32>
    %69 = arith.addf %67, %68 : vector<32x128xf32>
    %cst_20 = arith.constant 0.000000e+00 : f32
    %70 = vector.broadcast %cst_20 : f32 to vector<32x128xf32>
    %71 = arith.maximumf %69, %70 : vector<32x128xf32>
    %c1_i32_21 = arith.constant 1 : i32
    %72 = tpu.dynamic_rotate %71 by %c1_i32_21 dim 0 : vector<32x128xf32>, i32 -> vector<32x128xf32>
    %cst_22 = arith.constant 0.000000e+00 : f32
    %73 = vector.broadcast %cst_22 : f32 to vector<32x128xf32>
    %74 = arith.select %20, %72, %73 : vector<32x128xi1>, vector<32x128xf32>
    %c31_i32_23 = arith.constant 31 : i32
    %75 = tpu.dynamic_rotate %71 by %c31_i32_23 dim 0 : vector<32x128xf32>, i32 -> vector<32x128xf32>
    %cst_24 = arith.constant 0.000000e+00 : f32
    %76 = vector.broadcast %cst_24 : f32 to vector<32x128xf32>
    %77 = arith.select %22, %75, %76 : vector<32x128xi1>, vector<32x128xf32>
    %78 = tpu.concatenate %74, %71, %77 in 1 : vector<32x128xf32>, vector<32x128xf32>, vector<32x128xf32> -> vector<32x384xf32>
    %79 = arith.truncf %78 : vector<32x384xf32> to vector<32x384xbf16>
    %c1 = arith.constant 1 : index
    %c0_25 = arith.constant 0 : index
    %c0_26 = arith.constant 0 : index
    %80 = vector.load %arg2[%c1, %c0_25, %c0_26] : memref<2x384x128xbf16, #tpu.memory_space<vmem>>, vector<1x384x128xbf16>
    %81 = vector.shape_cast %80 : vector<1x384x128xbf16> to vector<384x128xbf16>
    %cst_27 = arith.constant dense<0.000000e+00> : vector<32x128xf32>
    %82 = tpu.matmul %79, %81, %cst_27 {dimension_numbers = #tpu.dot_dimension_numbers<[1], [0], [0], [1], [0, 0, 1, 1], [], []>} : vector<32x384xbf16>, vector<384x128xbf16>, vector<32x128xf32> -> vector<32x128xf32>
    %83 = vector.extract_strided_slice %1 {offsets = [2, 0], sizes = [1, 128], strides = [1, 1]} : vector<4x128xf32> to vector<1x128xf32>
    %84 = vector.extract_strided_slice %1 {offsets = [3, 0], sizes = [1, 128], strides = [1, 1]} : vector<4x128xf32> to vector<1x128xf32>
    %cst_28 = arith.constant dense<0.000000e+00> : vector<128xf32>
    %85 = vector.multi_reduction <add>, %82, %cst_28 [0] : vector<32x128xf32> to vector<128xf32>
    %86 = vector.shape_cast %85 : vector<128xf32> to vector<1x128xf32>
    %87 = arith.mulf %82, %82 : vector<32x128xf32>
    %cst_29 = arith.constant dense<0.000000e+00> : vector<128xf32>
    %88 = vector.multi_reduction <add>, %87, %cst_29 [0] : vector<32x128xf32> to vector<128xf32>
    %89 = vector.shape_cast %88 : vector<128xf32> to vector<1x128xf32>
    %90 = tpu.concatenate %86, %89 in 0 : vector<1x128xf32>, vector<1x128xf32> -> vector<2x128xf32>
    %c8_i32_30 = arith.constant 8 : i32
    %91 = tpu.dynamic_rotate %90 by %c8_i32_30 dim 1 : vector<2x128xf32>, i32 -> vector<2x128xf32>
    %92 = arith.addf %90, %91 : vector<2x128xf32>
    %c16_i32_31 = arith.constant 16 : i32
    %93 = tpu.dynamic_rotate %92 by %c16_i32_31 dim 1 : vector<2x128xf32>, i32 -> vector<2x128xf32>
    %94 = arith.addf %92, %93 : vector<2x128xf32>
    %c32_i32_32 = arith.constant 32 : i32
    %95 = tpu.dynamic_rotate %94 by %c32_i32_32 dim 1 : vector<2x128xf32>, i32 -> vector<2x128xf32>
    %96 = arith.addf %94, %95 : vector<2x128xf32>
    %c64_i32_33 = arith.constant 64 : i32
    %97 = tpu.dynamic_rotate %96 by %c64_i32_33 dim 1 : vector<2x128xf32>, i32 -> vector<2x128xf32>
    %98 = arith.addf %96, %97 : vector<2x128xf32>
    %99 = vector.extract_strided_slice %98 {offsets = [0, 0], sizes = [1, 128], strides = [1, 1]} : vector<2x128xf32> to vector<1x128xf32>
    %cst_34 = arith.constant 0.001953125 : f32
    %100 = vector.broadcast %cst_34 : f32 to vector<1x128xf32>
    %101 = arith.mulf %99, %100 : vector<1x128xf32>
    %102 = vector.extract_strided_slice %98 {offsets = [1, 0], sizes = [1, 128], strides = [1, 1]} : vector<2x128xf32> to vector<1x128xf32>
    %cst_35 = arith.constant 0.001953125 : f32
    %103 = vector.broadcast %cst_35 : f32 to vector<1x128xf32>
    %104 = arith.mulf %102, %103 : vector<1x128xf32>
    %105 = arith.mulf %101, %101 : vector<1x128xf32>
    %106 = arith.subf %104, %105 : vector<1x128xf32>
    %cst_36 = arith.constant 0.000000e+00 : f32
    %107 = vector.broadcast %cst_36 : f32 to vector<1x128xf32>
    %108 = arith.maximumf %106, %107 : vector<1x128xf32>
    %cst_37 = arith.constant 9.99999974E-6 : f32
    %109 = vector.broadcast %cst_37 : f32 to vector<1x128xf32>
    %110 = arith.addf %108, %109 : vector<1x128xf32>
    %111 = math.rsqrt %110 : vector<1x128xf32>
    %112 = arith.mulf %83, %111 : vector<1x128xf32>
    %113 = arith.mulf %101, %112 : vector<1x128xf32>
    %114 = arith.subf %84, %113 : vector<1x128xf32>
    %115 = vector.broadcast %112 : vector<1x128xf32> to vector<32x128xf32>
    %116 = arith.mulf %82, %115 : vector<32x128xf32>
    %117 = vector.broadcast %114 : vector<1x128xf32> to vector<32x128xf32>
    %118 = arith.addf %116, %117 : vector<32x128xf32>
    %119 = arith.addf %118, %0 : vector<32x128xf32>
    %cst_38 = arith.constant 0.000000e+00 : f32
    %120 = vector.broadcast %cst_38 : f32 to vector<32x128xf32>
    %121 = arith.maximumf %119, %120 : vector<32x128xf32>
    %c0_39 = arith.constant 0 : index
    %c0_40 = arith.constant 0 : index
    %122 = vector.load %arg4[%c0_39, %c0_40] : memref<32x128xf32, #tpu.memory_space<vmem>>, vector<32x128xf32>
    tpu.vector_store %arg4[%c0_39, %c0_40], %121 {strides = array<i32>} : memref<32x128xf32, #tpu.memory_space<vmem>>, vector<32x128xf32>,
    return
  }
  func.func @transform_0(%arg0: i32) -> (i32, i32) {
    %c0_i32 = arith.constant 0 : i32
    %c0_i32_0 = arith.constant 0 : i32
    %c0_i32_1 = arith.constant 0 : i32
    return %c0_i32, %c0_i32_0 : i32, i32
  }
  func.func @transform_1(%arg0: i32) -> (i32, i32, i32) {
    %c0_i32 = arith.constant 0 : i32
    %c0_i32_0 = arith.constant 0 : i32
    %c0_i32_1 = arith.constant 0 : i32
    %c0_i32_2 = arith.constant 0 : i32
    return %c0_i32, %c0_i32_0, %c0_i32_1 : i32, i32, i32
  }
  func.func @transform_2(%arg0: i32) -> (i32, i32) {
    %c0_i32 = arith.constant 0 : i32
    %c0_i32_0 = arith.constant 0 : i32
    %c0_i32_1 = arith.constant 0 : i32
    return %c0_i32, %c0_i32_0 : i32, i32
  }
  func.func @transform_3(%arg0: i32) -> (i32, i32) {
    %c0_i32 = arith.constant 0 : i32
    %c0_i32_0 = arith.constant 0 : i32
    %c0_i32_1 = arith.constant 0 : i32
    return %c0_i32, %c0_i32_0 : i32, i32
  }
}

</mosaic_0001>

<llo_original>
// kernel: tpu_custom_call.1
$region0: #{tpu_custom_call.1}
  #allocation0 [shape = 'u32[]', space=smem, size = 0x4, offset = 0x4, fixed_abs, tag = 'smem constant byte address 0x4 - core index']
  #allocation1 [shape = 'u32[72,128]{1,0:T(1,128)}', space=vmem, size = 0x9000, scoped, tag = 'internal scratch']
  %s0 = inlined_call_operand.hbm [shape: f32[32,128], index: 0, kind: input, shape index: {}]
  %s1 = inlined_call_operand.hbm [shape: bf16[2,384,128], index: 1, kind: input, shape index: {}]
  %s2 = inlined_call_operand.hbm [shape: f32[4,128], index: 2, kind: input, shape index: {}]
  %s3 = inlined_call_operand.hbm [shape: f32[32,128], index: 3, kind: output, shape index: {}]
  %s4 = sld [smem:[#allocation0]]
  $region34: #{tpu_custom_call.1} parent=0
    _
  %s6 = ssub.s32 1, %s4
  %s7 = scalar_select 0, %s6, %s4
  $region1: #{tpu_custom_call.1} parent=0
    #allocation2 [shape = 'u8[16384]{0}', space=vmem, size = 0x4000, scoped, tag = 'input window, operand 0, single buffered']
    #allocation3 [shape = 's32[1]{0}', space=sflag, size = 0x4, scoped, tag = 'scoped memory for tpu_custom_call.1']
    #allocation4 [shape = 's32[1]{0}', space=sflag, size = 0x4, scoped, tag = 'scoped memory for tpu_custom_call.1']
    #allocation5 [shape = 'u8[196608]{0}', space=vmem, size = 0x30000, scoped, tag = 'input window, operand 1, single buffered']
    #allocation6 [shape = 's32[1]{0}', space=sflag, size = 0x4, scoped, tag = 'scoped memory for tpu_custom_call.1']
    #allocation7 [shape = 'u8[2048]{0}', space=vmem, size = 0x800, scoped, tag = 'input window, operand 2, single buffered']
    #allocation8 [shape = 'u8[16384]{0}', space=vmem, size = 0x4000, scoped, tag = 'output window, operand 0, single buffered']
    %8 = vsyncpa [#allocation3], 0
    %9 = vsyncpa [#allocation6], 0
    %10 = vsyncpa [#allocation4], 0
    // Predicated region
    $region2: #{tpu_custom_call.1} parent=1 // pred_check
      _
    $region3: #{tpu_custom_call.1} parent=1 // pred_check_branch
      %12 = sbr.rel (0) target = $region5
    $region4: #{tpu_custom_call.1} parent=1 // pred_region
      %14 = vsyncadd [#allocation3], 0
      %s15 = sshll.u32 %s0, 4
      %s16 = int_to_ptr.hbm [resolvable:$true] %s15
      %s17 = sshll.u32 [#allocation2], 4
      %s18 = int_to_ptr.vmem [resolvable:$true] %s17
      %23 = dma.hbm_to_vmem [thread:$0]  %s16, 512, %s18, [#allocation3], 128, 128, 8
    $region5: #{tpu_custom_call.1} parent=1 // pred_fallthru
      _
    // Predicated region
    $region6: #{tpu_custom_call.1} parent=1 // pred_check
      _
    $region7: #{tpu_custom_call.1} parent=1 // pred_check_branch
      %25 = sbr.rel (0) target = $region9
    $region8: #{tpu_custom_call.1} parent=1 // pred_region
      %27 = vsyncadd [#allocation6], 0
      %s28 = sshll.u32 %s1, 4
      %s29 = int_to_ptr.hbm [resolvable:$true] %s28
      %s30 = sshll.u32 [#allocation5], 4
      %s31 = int_to_ptr.vmem [resolvable:$true] %s30
      %36 = dma.hbm_to_vmem [thread:$0]  %s29, 6144, %s31, [#allocation6], 64, 64, 4
    $region9: #{tpu_custom_call.1} parent=1 // pred_fallthru
      _
    // Predicated region
    $region10: #{tpu_custom_call.1} parent=1 // pred_check
      _
    $region11: #{tpu_custom_call.1} parent=1 // pred_check_branch
      %38 = sbr.rel (0) target = $region13
    $region12: #{tpu_custom_call.1} parent=1 // pred_region
      %40 = vsyncadd [#allocation6], 0
      %s42 = sshll.u32 %s2, 4
      %s43 = int_to_ptr.hbm [resolvable:$true] %s42
      %s44 = sshll.u32 [#allocation7], 4
      %s45 = int_to_ptr.vmem [resolvable:$true] %s44
      %47 = dma.hbm_to_vmem [thread:$0]  %s43, 64, %s45, [#allocation6]
    $region13: #{tpu_custom_call.1} parent=1 // pred_fallthru
      _
    // Predicated region
    $region14: #{tpu_custom_call.1} parent=1 // pred_check
      _
    $region15: #{tpu_custom_call.1} parent=1 // pred_check_branch
      %49 = sbr.rel (0) target = $region17
    $region16: #{tpu_custom_call.1} parent=1 // pred_region
      %51 = dma.done [#allocation3], 512
    $region17: #{tpu_custom_call.1} parent=1 // pred_fallthru
      _
    // Predicated region
    $region18: #{tpu_custom_call.1} parent=1 // pred_check
      _
    $region19: #{tpu_custom_call.1} parent=1 // pred_check_branch
      %53 = sbr.rel (0) target = $region21
    $region20: #{tpu_custom_call.1} parent=1 // pred_region
      %55 = dma.done [#allocation6], 6144
    $region21: #{tpu_custom_call.1} parent=1 // pred_fallthru
      _
    // Predicated region
    $region22: #{tpu_custom_call.1} parent=1 // pred_check
      _
    $region23: #{tpu_custom_call.1} parent=1 // pred_check_branch
      %57 = sbr.rel (0) target = $region25
    $region24: #{tpu_custom_call.1} parent=1 // pred_region
      %59 = dma.done [#allocation6], 64
    $region25: #{tpu_custom_call.1} parent=1 // pred_fallthru
      _
    %v60 = vld [vmem:[#allocation2] sm:$0xff]
    %v61 = vld [vmem:[#allocation2 + $0x8] sm:$0xff]
    %v62 = vld [vmem:[#allocation2 + $0x10] sm:$0xff]
    %v63 = vld [vmem:[#allocation2 + $0x18] sm:$0xff]
    %v64 = vld [vmem:[#allocation7] sm:$0xf]
    %v65 = vlaneseq
    %v66 = vshrl.u32 %v65, 7
    %v67 = vadd.s32 %v66, 8
    %v68 = vadd.s32 %v66, 16
    %v69 = vadd.s32 %v66, 24
    %vm70 = vcmp.lt.s32.totalorder %v66, 0
    %v71 = vsub.s32 0, %v66
    %v72 = vsel %vm70, %v71, %v66
    %v73 = vshrl.u32 %v72, 4
    %v74 = vand.u32 %v72, 15
    %v75 = vsub.s32 0, %v74
    %v76 = vsel %vm70, %v75, %v74
    %vm77 = vcmp.lt.s32.totalorder %v67, 0
    %v78 = vsub.s32 0, %v67
    %v79 = vsel %vm77, %v78, %v67
    %v80 = vshrl.u32 %v79, 4
    %v81 = vand.u32 %v79, 15
    %v82 = vsub.s32 0, %v81
    %v83 = vsel %vm77, %v82, %v81
    %vm84 = vcmp.lt.s32.totalorder %v68, 0
    %v85 = vsub.s32 0, %v68
    %v86 = vsel %vm84, %v85, %v68
    %v87 = vshrl.u32 %v86, 4
    %v88 = vand.u32 %v86, 15
    %v89 = vsub.s32 0, %v88
    %v90 = vsel %vm84, %v89, %v88
    %vm91 = vcmp.lt.s32.totalorder %v69, 0
    %v92 = vsub.s32 0, %v69
    %v93 = vsel %vm91, %v92, %v69
    %v94 = vshrl.u32 %v93, 4
    %v95 = vand.u32 %v93, 15
    %v96 = vsub.s32 0, %v95
    %v97 = vsel %vm91, %v96, %v95
    %vm98 = vcmp.ne.s32.totalorder %v76, 0
    %vm99 = vcmp.ne.s32.totalorder %v83, 0
    %vm100 = vcmp.ne.s32.totalorder %v90, 0
    %vm101 = vcmp.ne.s32.totalorder %v97, 0
    %vm102 = vcmp.lt.s32.totalorder %v76, 0
    %vm103 = vcmp.lt.s32.totalorder %v83, 0
    %vm104 = vcmp.lt.s32.totalorder %v90, 0
    %vm105 = vcmp.lt.s32.totalorder %v97, 0
    %vm106 = vmand %vm102, %vm98
    %vm107 = vmand %vm103, %vm99
    %vm108 = vmand %vm104, %vm100
    %vm109 = vmand %vm105, %vm101
    %v110 = vadd.s32 %v76, 16
    %v111 = vadd.s32 %v83, 16
    %v112 = vadd.s32 %v90, 16
    %v113 = vadd.s32 %v97, 16
    %v114 = vsel %vm106, %v110, %v76
    %v115 = vsel %vm107, %v111, %v83
    %v116 = vsel %vm108, %v112, %v90
    %v117 = vsel %vm109, %v113, %v97
    %vm118 = vcmp.ge.s32.totalorder %v114, 1
    %vm119 = vcmp.ge.s32.totalorder %v115, 1
    %vm120 = vcmp.ge.s32.totalorder %v116, 1
    %vm121 = vcmp.ge.s32.totalorder %v117, 1
    %vm122 = vcmp.lt.s32.totalorder %v114, 15
    %vm123 = vcmp.lt.s32.totalorder %v115, 15
    %vm124 = vcmp.lt.s32.totalorder %v116, 15
    %vm125 = vcmp.lt.s32.totalorder %v117, 15
    %v126 = vrot.slane %v60, 7
    %v127 = vrot.slane %v61, 7
    %v128 = vrot.slane %v62, 7
    %v129 = vrot.slane %v63, 7
    %vm130 = vcmp.lt.s32.totalorder %v66, 1
    %v131 = vsel %vm130, %v128, %v129
    %v132 = vsel %vm130, %v127, %v128
    %v133 = vsel %vm130, %v126, %v127
    %v134 = vsel %vm130, %v129, %v126
    %v135 = vsel %vm118, %v134, 0.0
    %v136 = vsel %vm119, %v133, 0.0
    %v137 = vsel %vm120, %v132, 0.0
    %v138 = vsel %vm121, %v131, 0.0
    %v139 = vrot.slane %v60, 1
    %v140 = vrot.slane %v61, 1
    %v141 = vrot.slane %v62, 1
    %v142 = vrot.slane %v63, 1
    %vm143 = vcmp.lt.s32.totalorder %v66, 7
    %v144 = vsel %vm143, %v141, %v142
    %v145 = vsel %vm143, %v140, %v141
    %v146 = vsel %vm143, %v139, %v140
    %v147 = vsel %vm143, %v142, %v139
    %v148 = vsel %vm122, %v146, 0.0
    %v149 = vsel %vm123, %v145, 0.0
    %v150 = vsel %vm124, %v144, 0.0
    %v151 = vsel %vm125, %v147, 0.0
    %v152 = vpack.c.bf16 %v136, %v135
    %v153 = vpack.c.bf16 %v61, %v60
    %v154 = vpack.c.bf16 %v149, %v148
    %v155 = vpack.c.bf16 %v138, %v137
    %v156 = vpack.c.bf16 %v63, %v62
    %v157 = vpack.c.bf16 %v151, %v150
    %v158 = vld [vmem:[#allocation5] sm:$0xf]
    %v159 = vld [vmem:[#allocation5 + $0x4] sm:$0xf]
    %v160 = vld [vmem:[#allocation5 + $0x8] sm:$0xf]
    %v161 = vld [vmem:[#allocation5 + $0xc] sm:$0xf]
    %v162 = vld [vmem:[#allocation5 + $0x10] sm:$0xf]
    %v163 = vld [vmem:[#allocation5 + $0x14] sm:$0xf]
    %v164 = vld [vmem:[#allocation5 + $0x18] sm:$0xf]
    %v165 = vld [vmem:[#allocation5 + $0x1c] sm:$0xf]
    %v166 = vld [vmem:[#allocation5 + $0x20] sm:$0xf]
    %v167 = vld [vmem:[#allocation5 + $0x24] sm:$0xf]
    %v168 = vld [vmem:[#allocation5 + $0x28] sm:$0xf]
    %v169 = vld [vmem:[#allocation5 + $0x2c] sm:$0xf]
    %v170 = vld [vmem:[#allocation5 + $0x30] sm:$0xf]
    %v171 = vld [vmem:[#allocation5 + $0x34] sm:$0xf]
    %v172 = vld [vmem:[#allocation5 + $0x38] sm:$0xf]
    %v173 = vld [vmem:[#allocation5 + $0x3c] sm:$0xf]
    %v174 = vld [vmem:[#allocation5 + $0x40] sm:$0xf]
    %v175 = vld [vmem:[#allocation5 + $0x44] sm:$0xf]
    %v176 = vld [vmem:[#allocation5 + $0x48] sm:$0xf]
    %v177 = vld [vmem:[#allocation5 + $0x4c] sm:$0xf]
    %v178 = vld [vmem:[#allocation5 + $0x50] sm:$0xf]
    %v179 = vld [vmem:[#allocation5 + $0x54] sm:$0xf]
    %v180 = vld [vmem:[#allocation5 + $0x58] sm:$0xf]
    %v181 = vld [vmem:[#allocation5 + $0x5c] sm:$0xf]
    %v182 = vld [vmem:[#allocation5 + $0x60] sm:$0xf]
    %v183 = vld [vmem:[#allocation5 + $0x64] sm:$0xf]
    %v184 = vld [vmem:[#allocation5 + $0x68] sm:$0xf]
    %v185 = vld [vmem:[#allocation5 + $0x6c] sm:$0xf]
    %v186 = vld [vmem:[#allocation5 + $0x70] sm:$0xf]
    %v187 = vld [vmem:[#allocation5 + $0x74] sm:$0xf]
    %v188 = vld [vmem:[#allocation5 + $0x78] sm:$0xf]
    %v189 = vld [vmem:[#allocation5 + $0x7c] sm:$0xf]
    %v190 = vld [vmem:[#allocation5 + $0x80] sm:$0xf]
    %v191 = vld [vmem:[#allocation5 + $0x84] sm:$0xf]
    %v192 = vld [vmem:[#allocation5 + $0x88] sm:$0xf]
    %v193 = vld [vmem:[#allocation5 + $0x8c] sm:$0xf]
    %v194 = vld [vmem:[#allocation5 + $0x90] sm:$0xf]
    %v195 = vld [vmem:[#allocation5 + $0x94] sm:$0xf]
    %v196 = vld [vmem:[#allocation5 + $0x98] sm:$0xf]
    %v197 = vld [vmem:[#allocation5 + $0x9c] sm:$0xf]
    %v198 = vld [vmem:[#allocation5 + $0xa0] sm:$0xf]
    %v199 = vld [vmem:[#allocation5 + $0xa4] sm:$0xf]
    %v200 = vld [vmem:[#allocation5 + $0xa8] sm:$0xf]
    %v201 = vld [vmem:[#allocation5 + $0xac] sm:$0xf]
    %v202 = vld [vmem:[#allocation5 + $0xb0] sm:$0xf]
    %v203 = vld [vmem:[#allocation5 + $0xb4] sm:$0xf]
    %v204 = vld [vmem:[#allocation5 + $0xb8] sm:$0xf]
    %v205 = vld [vmem:[#allocation5 + $0xbc] sm:$0xf]
    %v254 = vunpack.c.l.b16 %v158
    %v255 = vunpack.c.l.b16 %v159
    %v256 = vunpack.c.l.b16 %v160
    %v257 = vunpack.c.l.b16 %v161
    %v258 = vunpack.c.l.b16 %v162
    %v259 = vunpack.c.l.b16 %v163
    %v260 = vunpack.c.l.b16 %v164
    %v261 = vunpack.c.l.b16 %v165
    %v262 = vunpack.c.l.b16 %v166
    %v263 = vunpack.c.l.b16 %v167
    %v264 = vunpack.c.l.b16 %v168
    %v265 = vunpack.c.l.b16 %v169
    %v266 = vunpack.c.l.b16 %v170
    %v267 = vunpack.c.l.b16 %v171
    %v268 = vunpack.c.l.b16 %v172
    %v269 = vunpack.c.l.b16 %v173
    %v270 = vunpack.c.l.b16 %v174
    %v271 = vunpack.c.l.b16 %v175
    %v272 = vunpack.c.l.b16 %v176
    %v273 = vunpack.c.l.b16 %v177
    %v274 = vunpack.c.l.b16 %v178
    %v275 = vunpack.c.l.b16 %v179
    %v276 = vunpack.c.l.b16 %v180
    %v277 = vunpack.c.l.b16 %v181
    %v278 = vunpack.c.l.b16 %v182
    %v279 = vunpack.c.l.b16 %v183
    %v280 = vunpack.c.l.b16 %v184
    %v281 = vunpack.c.l.b16 %v185
    %v282 = vunpack.c.l.b16 %v186
    %v283 = vunpack.c.l.b16 %v187
    %v284 = vunpack.c.l.b16 %v188
    %v285 = vunpack.c.l.b16 %v189
    %v286 = vunpack.c.l.b16 %v190
    %v287 = vunpack.c.l.b16 %v191
    %v288 = vunpack.c.l.b16 %v192
    %v289 = vunpack.c.l.b16 %v193
    %v290 = vunpack.c.l.b16 %v194
    %v291 = vunpack.c.l.b16 %v195
    %v292 = vunpack.c.l.b16 %v196
    %v293 = vunpack.c.l.b16 %v197
    %v294 = vunpack.c.l.b16 %v198
    %v295 = vunpack.c.l.b16 %v199
    %v296 = vunpack.c.l.b16 %v200
    %v297 = vunpack.c.l.b16 %v201
    %v298 = vunpack.c.l.b16 %v202
    %v299 = vunpack.c.l.b16 %v203
    %v300 = vunpack.c.l.b16 %v204
    %v301 = vunpack.c.l.b16 %v205
    %v302 = vpack.c.b16 %v255, %v254
    %v303 = vpack.c.b16 %v257, %v256
    %v304 = vpack.c.b16 %v259, %v258
    %v305 = vpack.c.b16 %v261, %v260
    %v306 = vpack.c.b16 %v263, %v262
    %v307 = vpack.c.b16 %v265, %v264
    %v308 = vpack.c.b16 %v267, %v266
    %v309 = vpack.c.b16 %v269, %v268
    %v310 = vpack.c.b16 %v271, %v270
    %v311 = vpack.c.b16 %v273, %v272
    %v312 = vpack.c.b16 %v275, %v274
    %v313 = vpack.c.b16 %v277, %v276
    %v314 = vpack.c.b16 %v279, %v278
    %v315 = vpack.c.b16 %v281, %v280
    %v316 = vpack.c.b16 %v283, %v282
    %v317 = vpack.c.b16 %v285, %v284
    %v318 = vpack.c.b16 %v287, %v286
    %v319 = vpack.c.b16 %v289, %v288
    %v320 = vpack.c.b16 %v291, %v290
    %v321 = vpack.c.b16 %v293, %v292
    %v322 = vpack.c.b16 %v295, %v294
    %v323 = vpack.c.b16 %v297, %v296
    %v324 = vpack.c.b16 %v299, %v298
    %v325 = vpack.c.b16 %v301, %v300
    %350 = vmatpush.bf16.msra.mxu0 %v309
    %351 = vmatpush.bf16.msra.mxu0 %v308
    %352 = vmatpush.bf16.msra.mxu0 %v307
    %353 = vmatpush.bf16.msra.mxu0 %v306
    %354 = vmatpush.bf16.msra.mxu0 %v305
    %355 = vmatpush.bf16.msra.mxu0 %v304
    %356 = vmatpush.bf16.msra.mxu0 %v303
    %357 = vmatpush.bf16.msra.mxu0 %v302
    %358 = vmatmul.bf16.gmra.mxu0 %v152
    %v359 = vpop.f32.mrf.mxu0
    %v360 = vadd.f32 0.0, %v359
    %v361 = vpop.f32.mrf.mxu0
    %v362 = vadd.f32 0.0, %v361
    %363 = vmatmul.bf16.gmra.mxu0 %v155
    %v364 = vpop.f32.mrf.mxu0
    %v365 = vadd.f32 0.0, %v364
    %v366 = vpop.f32.mrf.mxu0
    %v367 = vadd.f32 0.0, %v366
    %368 = vdwg.mxu0
    %369 = vmatpush.bf16.msra.mxu0 %v317
    %370 = vmatpush.bf16.msra.mxu0 %v316
    %371 = vmatpush.bf16.msra.mxu0 %v315
    %372 = vmatpush.bf16.msra.mxu0 %v314
    %373 = vmatpush.bf16.msra.mxu0 %v313
    %374 = vmatpush.bf16.msra.mxu0 %v312
    %375 = vmatpush.bf16.msra.mxu0 %v311
    %376 = vmatpush.bf16.msra.mxu0 %v310
    %377 = vmatmul.bf16.gmra.mxu0 %v153
    %v378 = vpop.f32.mrf.mxu0
    %v379 = vadd.f32 %v360, %v378
    %v380 = vpop.f32.mrf.mxu0
    %v381 = vadd.f32 %v362, %v380
    %382 = vmatmul.bf16.gmra.mxu0 %v156
    %v383 = vpop.f32.mrf.mxu0
    %v384 = vadd.f32 %v365, %v383
    %v385 = vpop.f32.mrf.mxu0
    %v386 = vadd.f32 %v367, %v385
    %387 = vdwg.mxu0
    %388 = vmatpush.bf16.msra.mxu0 %v325
    %389 = vmatpush.bf16.msra.mxu0 %v324
    %390 = vmatpush.bf16.msra.mxu0 %v323
    %391 = vmatpush.bf16.msra.mxu0 %v322
    %392 = vmatpush.bf16.msra.mxu0 %v321
    %393 = vmatpush.bf16.msra.mxu0 %v320
    %394 = vmatpush.bf16.msra.mxu0 %v319
    %395 = vmatpush.bf16.msra.mxu0 %v318
    %396 = vmatmul.bf16.gmra.mxu0 %v154
    %v397 = vpop.f32.mrf.mxu0
    %v398 = vadd.f32 %v379, %v397
    %v399 = vpop.f32.mrf.mxu0
    %v400 = vadd.f32 %v381, %v399
    %401 = vmatmul.bf16.gmra.mxu0 %v157
    %v402 = vpop.f32.mrf.mxu0
    %v403 = vadd.f32 %v384, %v402
    %v404 = vpop.f32.mrf.mxu0
    %v405 = vadd.f32 %v386, %v404
    %406 = vdwg.mxu0
    %v407 = vadd.f32 %v398, %v400
    %v408 = vadd.f32 %v407, %v403
    %v409 = vadd.f32 %v408, %v405
    %v410 = vrot.slane %v409, 4
    %v411 = vadd.f32 %v409, %v410
    %v412 = vrot.slane %v411, 2
    %v413 = vadd.f32 %v411, %v412
    %v414 = vrot.slane %v413, 1
    %v415 = vadd.f32 %v413, %v414
    %v416 = vmul.f32 %v398, %v398
    %v417 = vmul.f32 %v400, %v400
    %v418 = vmul.f32 %v403, %v403
    %v419 = vmul.f32 %v405, %v405
    %v420 = vadd.f32 %v416, %v417
    %v421 = vadd.f32 %v420, %v418
    %v422 = vadd.f32 %v421, %v419
    %v423 = vrot.slane %v422, 4
    %v424 = vadd.f32 %v422, %v423
    %v425 = vrot.slane %v424, 2
    %v426 = vadd.f32 %v424, %v425
    %v427 = vrot.slane %v426, 1
    %v428 = vadd.f32 %v426, %v427
    %vm429 = vcmask 1040384
    %v430 = vsel %vm429, %v415, %v428
    %431 = vrot.lane.b32.xlu0 %v430, 8
    %v432 = vpop.permute.xlu0 %431
    %v433 = vadd.f32 %v430, %v432
    %434 = vrot.lane.b32.xlu0 %v433, 16
    %v435 = vpop.permute.xlu0 %434
    %v436 = vadd.f32 %v433, %v435
    %437 = vrot.lane.b32.xlu0 %v436, 32
    %v438 = vpop.permute.xlu0 %437
    %v439 = vadd.f32 %v436, %v438
    %440 = vrot.lane.b32.xlu0 %v439, 64
    %v441 = vpop.permute.xlu0 %440
    %v442 = vadd.f32 %v439, %v441
    %v443 = vmul.f32 %v442, 0.001953125
    %v444 = vmul.f32 %v443, %v443
    %v446 = vrot.slane %v444, 7
    %v448 = vsub.f32 %v443, %v446
    %v449 = vmax.f32 %v448, 0.0
    %v450 = vadd.f32 %v449, 1e-05
    %v451 = vrsqrt.pop %v450
    %v452 = vmul.f32 %v451, %v450
    %v453 = vmul.f32 %v452, %v451
    %v454 = vmul.f32 0.5, %v453
    %v455 = vsub.f32 1.5, %v454
    %v456 = vmul.f32 %v451, %v455
    %vm457 = vweird.f32 %v450
    %vm458 = vweird.f32 %v451
    %vm459 = vmor %vm457, %vm458
    %v460 = vsel %vm459, %v451, %v456
    %v462 = vrot.slane %v460, 1
    %v464 = vmul.f32 %v64, %v462
    %v465 = vmul.f32 %v443, %v464
    %v467 = vrot.slane %v465, 7
    %v469 = vsub.f32 %v64, %v467
    %v470 = vperm.slane %v464, 0
    %v471 = vmul.f32 %v398, %v470
    %v472 = vmul.f32 %v400, %v470
    %v473 = vmul.f32 %v403, %v470
    %v474 = vmul.f32 %v405, %v470
    %v475 = vperm.slane %v469, 1
    %v476 = vadd.f32 %v471, %v475
    %v477 = vadd.f32 %v472, %v475
    %v478 = vadd.f32 %v473, %v475
    %v479 = vadd.f32 %v474, %v475
    %v480 = vmax.f32 %v476, 0.0
    %v481 = vmax.f32 %v477, 0.0
    %v482 = vmax.f32 %v478, 0.0
    %v483 = vmax.f32 %v479, 0.0
    %v484 = vrot.slane %v480, 7
    %v485 = vrot.slane %v481, 7
    %v486 = vrot.slane %v482, 7
    %v487 = vrot.slane %v483, 7
    %v488 = vsel %vm130, %v486, %v487
    %v489 = vsel %vm130, %v485, %v486
    %v490 = vsel %vm130, %v484, %v485
    %v491 = vsel %vm130, %v487, %v484
    %v492 = vsel %vm118, %v491, 0.0
    %v493 = vsel %vm119, %v490, 0.0
    %v494 = vsel %vm120, %v489, 0.0
    %v495 = vsel %vm121, %v488, 0.0
    %v496 = vrot.slane %v480, 1
    %v497 = vrot.slane %v481, 1
    %v498 = vrot.slane %v482, 1
    %v499 = vrot.slane %v483, 1
    %v500 = vsel %vm143, %v498, %v499
    %v501 = vsel %vm143, %v497, %v498
    %v502 = vsel %vm143, %v496, %v497
    %v503 = vsel %vm143, %v499, %v496
    %v504 = vsel %vm122, %v502, 0.0
    %v505 = vsel %vm123, %v501, 0.0
    %v506 = vsel %vm124, %v500, 0.0
    %v507 = vsel %vm125, %v503, 0.0
    %v508 = vpack.c.bf16 %v493, %v492
    %v509 = vpack.c.bf16 %v481, %v480
    %v510 = vpack.c.bf16 %v505, %v504
    %v511 = vpack.c.bf16 %v495, %v494
    %v512 = vpack.c.bf16 %v483, %v482
    %v513 = vpack.c.bf16 %v507, %v506
    %s514 = scalar_lea.vmem [#allocation5], 192
    %v515 = vld [vmem:[%s514] sm:$0xf]
    %v516 = vld [vmem:[%s514 + $0x4] sm:$0xf]
    %v517 = vld [vmem:[%s514 + $0x8] sm:$0xf]
    %v518 = vld [vmem:[%s514 + $0xc] sm:$0xf]
    %v519 = vld [vmem:[%s514 + $0x10] sm:$0xf]
    %v520 = vld [vmem:[%s514 + $0x14] sm:$0xf]
    %v521 = vld [vmem:[%s514 + $0x18] sm:$0xf]
    %v522 = vld [vmem:[%s514 + $0x1c] sm:$0xf]
    %v523 = vld [vmem:[%s514 + $0x20] sm:$0xf]
    %v524 = vld [vmem:[%s514 + $0x24] sm:$0xf]
    %v525 = vld [vmem:[%s514 + $0x28] sm:$0xf]
    %v526 = vld [vmem:[%s514 + $0x2c] sm:$0xf]
    %v527 = vld [vmem:[%s514 + $0x30] sm:$0xf]
    %v528 = vld [vmem:[%s514 + $0x34] sm:$0xf]
    %v529 = vld [vmem:[%s514 + $0x38] sm:$0xf]
    %v530 = vld [vmem:[%s514 + $0x3c] sm:$0xf]
    %v531 = vld [vmem:[%s514 + $0x40] sm:$0xf]
    %v532 = vld [vmem:[%s514 + $0x44] sm:$0xf]
    %v533 = vld [vmem:[%s514 + $0x48] sm:$0xf]
    %v534 = vld [vmem:[%s514 + $0x4c] sm:$0xf]
    %v535 = vld [vmem:[%s514 + $0x50] sm:$0xf]
    %v536 = vld [vmem:[%s514 + $0x54] sm:$0xf]
    %v537 = vld [vmem:[%s514 + $0x58] sm:$0xf]
    %v538 = vld [vmem:[%s514 + $0x5c] sm:$0xf]
    %v539 = vld [vmem:[%s514 + $0x60] sm:$0xf]
    %v540 = vld [vmem:[%s514 + $0x64] sm:$0xf]
    %v541 = vld [vmem:[%s514 + $0x68] sm:$0xf]
    %v542 = vld [vmem:[%s514 + $0x6c] sm:$0xf]
    %v543 = vld [vmem:[%s514 + $0x70] sm:$0xf]
    %v544 = vld [vmem:[%s514 + $0x74] sm:$0xf]
    %v545 = vld [vmem:[%s514 + $0x78] sm:$0xf]
    %v546 = vld [vmem:[%s514 + $0x7c] sm:$0xf]
    %v547 = vld [vmem:[%s514 + $0x80] sm:$0xf]
    %v548 = vld [vmem:[%s514 + $0x84] sm:$0xf]
    %v549 = vld [vmem:[%s514 + $0x88] sm:$0xf]
    %v550 = vld [vmem:[%s514 + $0x8c] sm:$0xf]
    %v551 = vld [vmem:[%s514 + $0x90] sm:$0xf]
    %v552 = vld [vmem:[%s514 + $0x94] sm:$0xf]
    %v553 = vld [vmem:[%s514 + $0x98] sm:$0xf]
    %v554 = vld [vmem:[%s514 + $0x9c] sm:$0xf]
    %v555 = vld [vmem:[%s514 + $0xa0] sm:$0xf]
    %v556 = vld [vmem:[%s514 + $0xa4] sm:$0xf]
    %v557 = vld [vmem:[%s514 + $0xa8] sm:$0xf]
    %v558 = vld [vmem:[%s514 + $0xac] sm:$0xf]
    %v559 = vld [vmem:[%s514 + $0xb0] sm:$0xf]
    %v560 = vld [vmem:[%s514 + $0xb4] sm:$0xf]
    %v561 = vld [vmem:[%s514 + $0xb8] sm:$0xf]
    %v562 = vld [vmem:[%s514 + $0xbc] sm:$0xf]
    %v611 = vunpack.c.l.b16 %v515
    %v612 = vunpack.c.l.b16 %v516
    %v613 = vunpack.c.l.b16 %v517
    %v614 = vunpack.c.l.b16 %v518
    %v615 = vunpack.c.l.b16 %v519
    %v616 = vunpack.c.l.b16 %v520
    %v617 = vunpack.c.l.b16 %v521
    %v618 = vunpack.c.l.b16 %v522
    %v619 = vunpack.c.l.b16 %v523
    %v620 = vunpack.c.l.b16 %v524
    %v621 = vunpack.c.l.b16 %v525
    %v622 = vunpack.c.l.b16 %v526
    %v623 = vunpack.c.l.b16 %v527
    %v624 = vunpack.c.l.b16 %v528
    %v625 = vunpack.c.l.b16 %v529
    %v626 = vunpack.c.l.b16 %v530
    %v627 = vunpack.c.l.b16 %v531
    %v628 = vunpack.c.l.b16 %v532
    %v629 = vunpack.c.l.b16 %v533
    %v630 = vunpack.c.l.b16 %v534
    %v631 = vunpack.c.l.b16 %v535
    %v632 = vunpack.c.l.b16 %v536
    %v633 = vunpack.c.l.b16 %v537
    %v634 = vunpack.c.l.b16 %v538
    %v635 = vunpack.c.l.b16 %v539
    %v636 = vunpack.c.l.b16 %v540
    %v637 = vunpack.c.l.b16 %v541
    %v638 = vunpack.c.l.b16 %v542
    %v639 = vunpack.c.l.b16 %v543
    %v640 = vunpack.c.l.b16 %v544
    %v641 = vunpack.c.l.b16 %v545
    %v642 = vunpack.c.l.b16 %v546
    %v643 = vunpack.c.l.b16 %v547
    %v644 = vunpack.c.l.b16 %v548
    %v645 = vunpack.c.l.b16 %v549
    %v646 = vunpack.c.l.b16 %v550
    %v647 = vunpack.c.l.b16 %v551
    %v648 = vunpack.c.l.b16 %v552
    %v649 = vunpack.c.l.b16 %v553
    %v650 = vunpack.c.l.b16 %v554
    %v651 = vunpack.c.l.b16 %v555
    %v652 = vunpack.c.l.b16 %v556
    %v653 = vunpack.c.l.b16 %v557
    %v654 = vunpack.c.l.b16 %v558
    %v655 = vunpack.c.l.b16 %v559
    %v656 = vunpack.c.l.b16 %v560
    %v657 = vunpack.c.l.b16 %v561
    %v658 = vunpack.c.l.b16 %v562
    %v659 = vpack.c.b16 %v612, %v611
    %v660 = vpack.c.b16 %v614, %v613
    %v661 = vpack.c.b16 %v616, %v615
    %v662 = vpack.c.b16 %v618, %v617
    %v663 = vpack.c.b16 %v620, %v619
    %v664 = vpack.c.b16 %v622, %v621
    %v665 = vpack.c.b16 %v624, %v623
    %v666 = vpack.c.b16 %v626, %v625
    %v667 = vpack.c.b16 %v628, %v627
    %v668 = vpack.c.b16 %v630, %v629
    %v669 = vpack.c.b16 %v632, %v631
    %v670 = vpack.c.b16 %v634, %v633
    %v671 = vpack.c.b16 %v636, %v635
    %v672 = vpack.c.b16 %v638, %v637
    %v673 = vpack.c.b16 %v640, %v639
    %v674 = vpack.c.b16 %v642, %v641
    %v675 = vpack.c.b16 %v644, %v643
    %v676 = vpack.c.b16 %v646, %v645
    %v677 = vpack.c.b16 %v648, %v647
    %v678 = vpack.c.b16 %v650, %v649
    %v679 = vpack.c.b16 %v652, %v651
    %v680 = vpack.c.b16 %v654, %v653
    %v681 = vpack.c.b16 %v656, %v655
    %v682 = vpack.c.b16 %v658, %v657
    %707 = vmatpush.bf16.msra.mxu0 %v666
    %708 = vmatpush.bf16.msra.mxu0 %v665
    %709 = vmatpush.bf16.msra.mxu0 %v664
    %710 = vmatpush.bf16.msra.mxu0 %v663
    %711 = vmatpush.bf16.msra.mxu0 %v662
    %712 = vmatpush.bf16.msra.mxu0 %v661
    %713 = vmatpush.bf16.msra.mxu0 %v660
    %714 = vmatpush.bf16.msra.mxu0 %v659
    %715 = vmatmul.bf16.gmra.mxu0 %v508
    %v716 = vpop.f32.mrf.mxu0
    %v717 = vadd.f32 0.0, %v716
    %v718 = vpop.f32.mrf.mxu0
    %v719 = vadd.f32 0.0, %v718
    %720 = vmatmul.bf16.gmra.mxu0 %v511
    %v721 = vpop.f32.mrf.mxu0
    %v722 = vadd.f32 0.0, %v721
    %v723 = vpop.f32.mrf.mxu0
    %v724 = vadd.f32 0.0, %v723
    %725 = vdwg.mxu0
    %726 = vmatpush.bf16.msra.mxu0 %v674
    %727 = vmatpush.bf16.msra.mxu0 %v673
    %728 = vmatpush.bf16.msra.mxu0 %v672
    %729 = vmatpush.bf16.msra.mxu0 %v671
    %730 = vmatpush.bf16.msra.mxu0 %v670
    %731 = vmatpush.bf16.msra.mxu0 %v669
    %732 = vmatpush.bf16.msra.mxu0 %v668
    %733 = vmatpush.bf16.msra.mxu0 %v667
    %734 = vmatmul.bf16.gmra.mxu0 %v509
    %v735 = vpop.f32.mrf.mxu0
    %v736 = vadd.f32 %v717, %v735
    %v737 = vpop.f32.mrf.mxu0
    %v738 = vadd.f32 %v719, %v737
    %739 = vmatmul.bf16.gmra.mxu0 %v512
    %v740 = vpop.f32.mrf.mxu0
    %v741 = vadd.f32 %v722, %v740
    %v742 = vpop.f32.mrf.mxu0
    %v743 = vadd.f32 %v724, %v742
    %744 = vdwg.mxu0
    %745 = vmatpush.bf16.msra.mxu0 %v682
    %746 = vmatpush.bf16.msra.mxu0 %v681
    %747 = vmatpush.bf16.msra.mxu0 %v680
    %748 = vmatpush.bf16.msra.mxu0 %v679
    %749 = vmatpush.bf16.msra.mxu0 %v678
    %750 = vmatpush.bf16.msra.mxu0 %v677
    %751 = vmatpush.bf16.msra.mxu0 %v676
    %752 = vmatpush.bf16.msra.mxu0 %v675
    %753 = vmatmul.bf16.gmra.mxu0 %v510
    %v754 = vpop.f32.mrf.mxu0
    %v755 = vadd.f32 %v736, %v754
    %v756 = vpop.f32.mrf.mxu0
    %v757 = vadd.f32 %v738, %v756
    %758 = vmatmul.bf16.gmra.mxu0 %v513
    %v759 = vpop.f32.mrf.mxu0
    %v760 = vadd.f32 %v741, %v759
    %v761 = vpop.f32.mrf.mxu0
    %v762 = vadd.f32 %v743, %v761
    %763 = vdwg.mxu0
    %v764 = vadd.f32 %v755, %v757
    %v765 = vadd.f32 %v764, %v760
    %v766 = vadd.f32 %v765, %v762
    %v767 = vrot.slane %v766, 4
    %v768 = vadd.f32 %v766, %v767
    %v769 = vrot.slane %v768, 2
    %v770 = vadd.f32 %v768, %v769
    %v771 = vrot.slane %v770, 1
    %v772 = vadd.f32 %v770, %v771
    %v773 = vmul.f32 %v755, %v755
    %v774 = vmul.f32 %v757, %v757
    %v775 = vmul.f32 %v760, %v760
    %v776 = vmul.f32 %v762, %v762
    %v777 = vadd.f32 %v773, %v774
    %v778 = vadd.f32 %v777, %v775
    %v779 = vadd.f32 %v778, %v776
    %v780 = vrot.slane %v779, 4
    %v781 = vadd.f32 %v779, %v780
    %v782 = vrot.slane %v781, 2
    %v783 = vadd.f32 %v781, %v782
    %v784 = vrot.slane %v783, 1
    %v785 = vadd.f32 %v783, %v784
    %v786 = vsel %vm429, %v772, %v785
    %787 = vrot.lane.b32.xlu0 %v786, 8
    %v788 = vpop.permute.xlu0 %787
    %v789 = vadd.f32 %v786, %v788
    %790 = vrot.lane.b32.xlu0 %v789, 16
    %v791 = vpop.permute.xlu0 %790
    %v792 = vadd.f32 %v789, %v791
    %793 = vrot.lane.b32.xlu0 %v792, 32
    %v794 = vpop.permute.xlu0 %793
    %v795 = vadd.f32 %v792, %v794
    %796 = vrot.lane.b32.xlu0 %v795, 64
    %v797 = vpop.permute.xlu0 %796
    %v798 = vadd.f32 %v795, %v797
    %v799 = vmul.f32 %v798, 0.001953125
    %v800 = vmul.f32 %v799, %v799
    %v802 = vrot.slane %v800, 7
    %v804 = vsub.f32 %v799, %v802
    %v805 = vmax.f32 %v804, 0.0
    %v806 = vadd.f32 %v805, 1e-05
    %v807 = vrsqrt.pop %v806
    %v808 = vmul.f32 %v807, %v806
    %v809 = vmul.f32 %v808, %v807
    %v810 = vmul.f32 0.5, %v809
    %v811 = vsub.f32 1.5, %v810
    %v812 = vmul.f32 %v807, %v811
    %vm813 = vweird.f32 %v806
    %vm814 = vweird.f32 %v807
    %vm815 = vmor %vm813, %vm814
    %v816 = vsel %vm815, %v807, %v812
    %v818 = vrot.slane %v816, 7
    %v820 = vmul.f32 %v64, %v818
    %v822 = vrot.slane %v820, 2
    %v824 = vmul.f32 %v799, %v822
    %v826 = vrot.slane %v824, 5
    %v828 = vsub.f32 %v64, %v826
    %v829 = vperm.slane %v820, 2
    %v830 = vmul.f32 %v755, %v829
    %v831 = vmul.f32 %v757, %v829
    %v832 = vmul.f32 %v760, %v829
    %v833 = vmul.f32 %v762, %v829
    %v834 = vperm.slane %v828, 3
    %v835 = vadd.f32 %v830, %v834
    %v836 = vadd.f32 %v831, %v834
    %v837 = vadd.f32 %v832, %v834
    %v838 = vadd.f32 %v833, %v834
    %v839 = vadd.f32 %v835, %v60
    %v840 = vadd.f32 %v836, %v61
    %v841 = vadd.f32 %v837, %v62
    %v842 = vadd.f32 %v838, %v63
    %v843 = vmax.f32 %v839, 0.0
    %v844 = vmax.f32 %v840, 0.0
    %v845 = vmax.f32 %v841, 0.0
    %v846 = vmax.f32 %v842, 0.0
    %847 = vst [vmem:[#allocation8] sm:$0xff] %v843
    %848 = vst [vmem:[#allocation8 + $0x8] sm:$0xff] %v844
    %849 = vst [vmem:[#allocation8 + $0x10] sm:$0xff] %v845
    %850 = vst [vmem:[#allocation8 + $0x18] sm:$0xff] %v846
    // Predicated region
    $region26: #{tpu_custom_call.1} parent=1 // pred_check
      _
    $region27: #{tpu_custom_call.1} parent=1 // pred_check_branch
      %852 = sbr.rel (0) target = $region29
    $region28: #{tpu_custom_call.1} parent=1 // pred_region
      %854 = vsyncadd [#allocation4], 0
      %s855 = sshll.u32 [#allocation8], 4
      %s856 = int_to_ptr.vmem [resolvable:$true] %s855
      %s857 = sshll.u32 %s3, 4
      %s858 = int_to_ptr.hbm [resolvable:$true] %s857
      %863 = dma.vmem_to_hbm [thread:$0]  %s856, 512, %s858, [#allocation4], 128, 128, 8
    $region29: #{tpu_custom_call.1} parent=1 // pred_fallthru
      _
    // Predicated region
    $region30: #{tpu_custom_call.1} parent=1 // pred_check
      _
    $region31: #{tpu_custom_call.1} parent=1 // pred_check_branch
      %865 = sbr.rel (0) target = $region33
    $region32: #{tpu_custom_call.1} parent=1 // pred_region
      %867 = dma.done [#allocation4], 512
    $region33: #{tpu_custom_call.1} parent=1 // pred_fallthru
      _
    %868 = vsyncpa [#allocation3], 1
    %869 = vsyncpa [#allocation6], 1
    %870 = vsyncpa [#allocation4], 1

</llo_original>
